<compile_context>
chip_gen: v6e
topology: v6e:2x2x1
jax: 0.10.0
libtpu: 0.0.40
codegen_flags: <defaults>
</compile_context>

<pallas_src>
import functools

import jax
import jax.numpy as jnp
from jax.experimental import pallas as pl
from jax.experimental.pallas import tpu as pltpu


_GRIDLESS_MAX_ROWS = 4096   # below this: single gridless invocation (min overhead)
_ROW_TILE = 1024            # row tile for the pipelined large-batch path


def _fused_head_kernel(x_ref, w_ref, o_ref, *, f):
    """x_ref: [tm, F] bf16;  w_ref: [rows, D] bf16 with rows 0..F-1 = [W_pi^T|W_vf^T],
    row F = [b_pi|b_vf], remaining (sublane-pad) rows = 0;  o_ref: [tm, D] f32."""
    x = x_ref[...]
    w = w_ref[0:f, :]                                  # weight block (F is sublane-aligned)
    b = w_ref[f:f + 1, :].astype(jnp.float32)          # bias row; add on VPU (free slack)
    y = jnp.dot(x, w, preferred_element_type=jnp.float32) + b
    o_ref[...] = jnp.maximum(y, 0.0).astype(o_ref.dtype)


def fuse_params(w_pi, b_pi, w_vf, b_vf, *, dtype=jnp.bfloat16):
    """One-time parameter prep (init-time, outside the hot path).

    PyTorch nn.Linear layout: W [out, in], b [out].  Returns a single packed
    bf16 operand (one fewer input DMA than separate weight + bias):
      packed[:F, :]   = [W_pi^T | W_vf^T]          -> [F, D_pi + D_vf]
      packed[F, :]    = [b_pi | b_vf]
      packed[F+1:, :] = 0  (sublane padding to a multiple of 8 rows)
    """
    w = jnp.concatenate([jnp.asarray(w_pi).T, jnp.asarray(w_vf).T], axis=1)
    b = jnp.concatenate([jnp.asarray(b_pi), jnp.asarray(b_vf)])
    f, d = w.shape
    rows = ((f + 1 + 7) // 8) * 8
    packed = jnp.zeros((rows, d), dtype)
    packed = packed.at[:f, :].set(w.astype(dtype))
    packed = packed.at[f, :].set(b.astype(dtype))
    return packed


def _forward_fused(features, w_packed):
    """features: [B, F];  w_packed: [rows, D] from fuse_params.
    Returns the fused, lane-dense [B, D_pi + D_vf] activation (f32)."""
    B, F = features.shape
    D = w_packed.shape[1]
    x = features.astype(w_packed.dtype)                 # bf16: native MXU path, half the x DMA
    kernel = functools.partial(_fused_head_kernel, f=F)

    if B <= _GRIDLESS_MAX_ROWS:
        # Launch-overhead regime: gridless whole-array call, no pipeline
        # prologue/epilogue, no double buffering, exactly one MXU dot.
        return pl.pallas_call(
            kernel,
            out_shape=jax.ShapeDtypeStruct((B, D), jnp.float32),
            in_specs=[
                pl.BlockSpec(memory_space=pltpu.MemorySpace.VMEM),
                pl.BlockSpec(memory_space=pltpu.MemorySpace.VMEM),
            ],
            out_specs=pl.BlockSpec(memory_space=pltpu.MemorySpace.VMEM),
        )(x, w_packed)

    # Large batch: tile rows so VMEM stays bounded on every generation and the
    # x/out DMAs pipeline with compute; weights stay resident across tiles.
    tm = _ROW_TILE
    B_pad = ((B + tm - 1) // tm) * tm
    if B_pad != B:
        x = jnp.pad(x, ((0, B_pad - B), (0, 0)))
    out = pl.pallas_call(
        kernel,
        out_shape=jax.ShapeDtypeStruct((B_pad, D), jnp.float32),
        grid_spec=pltpu.PrefetchScalarGridSpec(
            num_scalar_prefetch=0,
            grid=(B_pad // tm,),
            in_specs=[
                pl.BlockSpec((tm, F), lambda i: (i, 0)),
                pl.BlockSpec(w_packed.shape, lambda i: (0, 0)),   # resident weights
            ],
            out_specs=pl.BlockSpec((tm, D), lambda i: (i, 0)),
        ),
        compiler_params=pltpu.CompilerParams(
            # Independent row tiles -> v7x shards them across both TensorCores.
            dimension_semantics=("parallel",),
        ),
    )(x, w_packed)
    return out[:B] if B_pad != B else out


# Preferred entry point for downstream Pallas consumers: keeps the lane-dense
# fused [B, 128] layout (pass d_pi as an offset instead of slicing).
single_layer_network_fused = jax.jit(_forward_fused)


@functools.partial(jax.jit, static_argnames=("d_pi",))
def single_layer_network(features, w_packed, *, d_pi):
    """PyTorch-module-equivalent forward: returns (pi, vf) as static slices of
    the fused output.  Prefer single_layer_network_fused when the consumer can
    take the fused block directly (avoids re-introducing 64-lane layouts)."""
    out = _forward_fused(features, w_packed)
    return out[:, :d_pi], out[:, d_pi:]


if __name__ == "__main__":
    feature_dim = 64
    layer_dim_pi = 64
    layer_dim_vf = 64   # D_pi + D_vf = 128 -> exactly one lane-dense MXU tile
    batch = 8

    key = jax.random.PRNGKey(0)
    kx, kwp, kbp, kwv, kbv, kbig = jax.random.split(key, 6)

    bound = 1.0 / (feature_dim ** 0.5)
    features = jax.random.normal(kx, (batch, feature_dim), dtype=jnp.float32)
    w_pi = jax.random.uniform(kwp, (layer_dim_pi, feature_dim), jnp.float32, -bound, bound)
    b_pi = jax.random.uniform(kbp, (layer_dim_pi,), jnp.float32, -bound, bound)
    w_vf = jax.random.uniform(kwv, (layer_dim_vf, feature_dim), jnp.float32, -bound, bound)
    b_vf = jax.random.uniform(kbv, (layer_dim_vf,), jnp.float32, -bound, bound)

    # One-time parameter fusion/packing (init-time, not per forward call).
    w_packed = fuse_params(w_pi, b_pi, w_vf, b_vf)
    jax.block_until_ready(w_packed)

    # --- Small-batch (gridless) path: matches the PyTorch forward signature. ---
    pi_out, vf_out = single_layer_network(features, w_packed, d_pi=layer_dim_pi)
    jax.block_until_ready((pi_out, vf_out))

    # Reference mirroring the kernel numerics: bf16 operands, f32 accumulate.
    def ref_heads(x):
        xb = x.astype(jnp.bfloat16).astype(jnp.float32)
        wp = w_pi.astype(jnp.bfloat16).astype(jnp.float32)
        bp = b_pi.astype(jnp.bfloat16).astype(jnp.float32)
        wv = w_vf.astype(jnp.bfloat16).astype(jnp.float32)
        bv = b_vf.astype(jnp.bfloat16).astype(jnp.float32)
        return (jnp.maximum(xb @ wp.T + bp, 0.0),
                jnp.maximum(xb @ wv.T + bv, 0.0))

    pi_ref, vf_ref = ref_heads(features)
    assert pi_out.shape == (batch, layer_dim_pi)
    assert vf_out.shape == (batch, layer_dim_vf)
    assert jnp.allclose(pi_out, pi_ref, atol=2e-3, rtol=2e-3), "policy head mismatch"
    assert jnp.allclose(vf_out, vf_ref, atol=2e-3, rtol=2e-3), "value head mismatch"

    # --- Large-batch (row-tiled, pipelined, weights resident) path. ---
    big_batch = 4100  # > _GRIDLESS_MAX_ROWS, not a tile multiple -> exercises padding
    big_features = jax.random.normal(kbig, (big_batch, feature_dim), dtype=jnp.float32)
    fused_big = single_layer_network_fused(big_features, w_packed)
    jax.block_until_ready(fused_big)
    pi_big_ref, vf_big_ref = ref_heads(big_features)
    fused_big_ref = jnp.concatenate([pi_big_ref, vf_big_ref], axis=1)
    assert fused_big.shape == (big_batch, layer_dim_pi + layer_dim_vf)
    assert jnp.allclose(fused_big, fused_big_ref, atol=2e-3, rtol=2e-3), "tiled path mismatch"

    print("KERNEL_OK")
</pallas_src>

<mosaic_0001>
module attributes {stable_mosaic.version = 11 : i64} {
  func.func @_fused_head_kernel(%arg0: memref<8x64xbf16, #tpu.memory_space<vmem>>, %arg1: memref<72x128xbf16, #tpu.memory_space<vmem>>, %arg2: memref<8x128xf32, #tpu.memory_space<vmem>>) attributes {dimension_semantics = [], scalar_prefetch = 0 : i64, scratch_operands = 0 : i64, tpu.core_type = #tpu.core_type<tc>} {
    %c0 = arith.constant 0 : index
    %c0_0 = arith.constant 0 : index
    %0 = vector.load %arg0[%c0, %c0_0] : memref<8x64xbf16, #tpu.memory_space<vmem>>, vector<8x64xbf16>
    %c0_1 = arith.constant 0 : index
    %c0_2 = arith.constant 0 : index
    %1 = vector.load %arg1[%c0_1, %c0_2] : memref<72x128xbf16, #tpu.memory_space<vmem>>, vector<64x128xbf16>
    %c64 = arith.constant 64 : index
    %c0_3 = arith.constant 0 : index
    %2 = vector.load %arg1[%c64, %c0_3] : memref<72x128xbf16, #tpu.memory_space<vmem>>, vector<1x128xbf16>
    %3 = arith.extf %2 : vector<1x128xbf16> to vector<1x128xf32>
    %cst = arith.constant dense<0.000000e+00> : vector<8x128xf32>
    %4 = tpu.matmul %0, %1, %cst {dimension_numbers = #tpu.dot_dimension_numbers<[1], [0], [0], [1], [0, 0, 1, 1], [], []>} : vector<8x64xbf16>, vector<64x128xbf16>, vector<8x128xf32> -> vector<8x128xf32>
    %5 = vector.broadcast %3 : vector<1x128xf32> to vector<8x128xf32>
    %6 = arith.addf %4, %5 : vector<8x128xf32>
    %cst_4 = arith.constant 0.000000e+00 : f32
    %7 = vector.broadcast %cst_4 : f32 to vector<8x128xf32>
    %8 = arith.maximumf %6, %7 : vector<8x128xf32>
    %c0_5 = arith.constant 0 : index
    %c0_6 = arith.constant 0 : index
    %9 = vector.load %arg2[%c0_5, %c0_6] : memref<8x128xf32, #tpu.memory_space<vmem>>, vector<8x128xf32>
    tpu.vector_store %arg2[%c0_5, %c0_6], %8 {strides = array<i32>} : memref<8x128xf32, #tpu.memory_space<vmem>>, vector<8x128xf32>,
    return
  }
}

</mosaic_0001>

<llo_original>
// kernel: single_layer_network.1
$region0: #{single_layer_network.1}
  #allocation0 [shape = 'u32[]', space=smem, size = 0x4, offset = 0x4, fixed_abs, tag = 'smem constant byte address 0x4 - core index']
  #allocation1 [shape = 'u32[144,128]{1,0:T(1,128)}', space=vmem, size = 0x12000, scoped, tag = 'internal scratch']
  %s0 = inlined_call_operand.vmem [shape: bf16[8,64], index: 0, kind: input, shape index: {}]
  %s1 = inlined_call_operand.hbm [shape: bf16[72,128], index: 1, kind: input, shape index: {}]
  %s2 = inlined_call_operand.vmem [shape: f32[8,128], index: 2, kind: output, shape index: {}]
  %s3 = sld [smem:[#allocation0]]
  $region22: #{single_layer_network.1} parent=0
    _
  %s5 = ssub.s32 1, %s3
  %s6 = scalar_select 0, %s5, %s3
  $region1: #{single_layer_network.1} parent=0
    #allocation2 [shape = 'u8[18432]{0}', space=vmem, size = 0x4800, scoped, tag = 'input window, operand 1, single buffered']
    #allocation3 [shape = 's32[1]{0}', space=sflag, size = 0x4, scoped, tag = 'scoped memory for single_layer_network.1']
    %7 = vsyncpa [#allocation3], 0
    // Predicated region
    $region2: #{single_layer_network.1} parent=1 // pred_check
      _
    $region3: #{single_layer_network.1} parent=1 // pred_check_branch
      %9 = sbr.rel (0) target = $region5
    $region4: #{single_layer_network.1} parent=1 // pred_region
      _
    $region5: #{single_layer_network.1} parent=1 // pred_fallthru
      _
    // Predicated region
    $region6: #{single_layer_network.1} parent=1 // pred_check
      _
    $region7: #{single_layer_network.1} parent=1 // pred_check_branch
      %11 = sbr.rel (0) target = $region9
    $region8: #{single_layer_network.1} parent=1 // pred_region
      %s13 = ssub.s32 576, 576
      %14 = vsyncadd [#allocation3], %s13
      %s15 = sshll.u32 [#allocation2], 4
      %s16 = int_to_ptr.vmem [resolvable:$true] %s15
      %21 = dma.hbm_to_vmem [thread:$0]  %s1, 576, %s16, [#allocation3], 64, 64, 4
    $region9: #{single_layer_network.1} parent=1 // pred_fallthru
      _
    // Predicated region
    $region10: #{single_layer_network.1} parent=1 // pred_check
      _
    $region11: #{single_layer_network.1} parent=1 // pred_check_branch
      %23 = sbr.rel (0) target = $region13
    $region12: #{single_layer_network.1} parent=1 // pred_region
      %24 = dma.done [#allocation3], 576
    $region13: #{single_layer_network.1} parent=1 // pred_fallthru
      _
    %v26 = vld [vmem:[%s0] sm:$0xf]
    %v27 = vld [vmem:[#allocation2] sm:$0xf]
    %v28 = vld [vmem:[#allocation2 + $0x4] sm:$0xf]
    %v29 = vld [vmem:[#allocation2 + $0x8] sm:$0xf]
    %v30 = vld [vmem:[#allocation2 + $0xc] sm:$0xf]
    %v31 = vld [vmem:[#allocation2 + $0x10] sm:$0xf]
    %v32 = vld [vmem:[#allocation2 + $0x14] sm:$0xf]
    %v33 = vld [vmem:[#allocation2 + $0x18] sm:$0xf]
    %v34 = vld [vmem:[#allocation2 + $0x1c] sm:$0xf]
    %v35 = vld [vmem:[#allocation2 + $0x20] sm:$0x1]
    %v36 = vunpack.c.l.bf16 %v35
    %v37 = vlaneseq
    %v38 = vshrl.u32 %v37, 7
    %v39 = vsub.s32 0, %v38
    %v40 = vrot.slane %v36, %v39
    %v49 = vunpack.c.l.b16 %v27
    %v50 = vunpack.c.l.b16 %v28
    %v51 = vunpack.c.l.b16 %v29
    %v52 = vunpack.c.l.b16 %v30
    %v53 = vunpack.c.l.b16 %v31
    %v54 = vunpack.c.l.b16 %v32
    %v55 = vunpack.c.l.b16 %v33
    %v56 = vunpack.c.l.b16 %v34
    %v57 = vpack.c.b16 %v50, %v49
    %v58 = vpack.c.b16 %v52, %v51
    %v59 = vpack.c.b16 %v54, %v53
    %v60 = vpack.c.b16 %v56, %v55
    %vm65 = vcmask 523264
    %v67 = vsel %vm65, %v26, 0
    %69 = vmatprep.subr.bf16.mxu0 0
    %70 = vmatpush1.bf16.msra.mxu0 0
    %71 = vmatprep.subr.bf16.mxu0 0
    %72 = vmatpush1.bf16.msra.mxu0 0
    %73 = vmatprep.subr.bf16.mxu0 0
    %74 = vmatpush1.bf16.msra.mxu0 0
    %75 = vmatprep.subr.bf16.mxu0 0
    %76 = vmatpush1.bf16.msra.mxu0 0
    %77 = vmatprep.subr.bf16.mxu0 0
    %78 = vmatpush1.bf16.msra.mxu0 %v60
    %79 = vmatprep.subr.bf16.mxu0 0
    %80 = vmatpush1.bf16.msra.mxu0 %v59
    %81 = vmatprep.subr.bf16.mxu0 0
    %82 = vmatpush1.bf16.msra.mxu0 %v58
    %83 = vmatprep.subr.bf16.mxu0 0
    %84 = vmatpush1.bf16.msra.mxu0 %v57
    %85 = vmatprep.subr.bf16.mxu0 0
    %86 = vmatpush2.bf16.msra.mxu0 0
    %87 = vmatprep.subr.bf16.mxu0 0
    %88 = vmatpush2.bf16.msra.mxu0 0
    %89 = vmatprep.subr.bf16.mxu0 0
    %90 = vmatpush2.bf16.msra.mxu0 0
    %91 = vmatprep.subr.bf16.mxu0 0
    %92 = vmatpush2.bf16.msra.mxu0 0
    %93 = vmatprep.subr.bf16.mxu0 0
    %94 = vmatpush2.bf16.msra.mxu0 0
    %95 = vmatprep.subr.bf16.mxu0 0
    %96 = vmatpush2.bf16.msra.mxu0 0
    %97 = vmatprep.subr.bf16.mxu0 0
    %98 = vmatpush2.bf16.msra.mxu0 0
    %99 = vmatprep.subr.bf16.mxu0 0
    %100 = vmatpush2.bf16.msra.mxu0 0
    %101 = vmatprep.mubr.bf16.mxu0 0
    %102 = vmatmul.mubr.bf16.gmra.mxu0 %v67
    %v103 = vpop.f32.mrf.mxu0
    %v104 = vadd.f32 %v40, %v103
    %v105 = vpop.f32.mrf.mxu0
    %v106 = vpop.f32.mrf.mxu0
    %v107 = vpop.f32.mrf.mxu0
    %108 = vdwg.mxu0
    %v109 = vmax.f32 %v104, 0.0
    %110 = vst [vmem:[%s2] sm:$0xff] %v109
    // Predicated region
    $region14: #{single_layer_network.1} parent=1 // pred_check
      _
    $region15: #{single_layer_network.1} parent=1 // pred_check_branch
      %112 = sbr.rel (0) target = $region17
    $region16: #{single_layer_network.1} parent=1 // pred_region
      _
    $region17: #{single_layer_network.1} parent=1 // pred_fallthru
      _
    // Predicated region
    $region18: #{single_layer_network.1} parent=1 // pred_check
      _
    $region19: #{single_layer_network.1} parent=1 // pred_check_branch
      %114 = sbr.rel (0) target = $region21
    $region20: #{single_layer_network.1} parent=1 // pred_region
      _
    $region21: #{single_layer_network.1} parent=1 // pred_fallthru
      _
    %115 = vsyncpa [#allocation3], 1

</llo_original>
